<compile_context>
chip_gen: v7x
topology: tpu7x:2x2x1
jax: 0.10.0
libtpu: 0.0.40
codegen_flags: <defaults>
</compile_context>

<pallas_src>
import functools

import jax
import jax.numpy as jnp
import numpy as np
from jax.experimental import pallas as pl
from jax.experimental.pallas import tpu as pltpu


def _custom_loss_kernel(logits_ref, tgt_ref, sub_ref, regp_ref, regt_ref,
                        loss_ref, fc_ref, loc_ref,
                        fc_acc, sel_acc, loc_acc, pos_acc,
                        *, alpha, gamma, num_reg, hw, tile):
    b = pl.program_id(0)
    t = pl.program_id(1)
    nb = pl.num_programs(0)
    nt = pl.num_programs(1)

    @pl.when(jnp.logical_and(b == 0, t == 0))
    def _init():
        fc_acc[...] = jnp.zeros_like(fc_acc)
        sel_acc[...] = jnp.zeros_like(sel_acc)
        loc_acc[...] = jnp.zeros_like(loc_acc)
        pos_acc[...] = jnp.zeros_like(pos_acc)

    x = logits_ref[...].astype(jnp.float32)      # (C, T) class logits, HW in lanes
    tgt = tgt_ref[...]                           # (1, T) int32 class labels
    sub = sub_ref[...]                           # (1, T) int32 sub_map
    regp = regp_ref[...].astype(jnp.float32)     # (R, T)
    regt = regt_ref[...].astype(jnp.float32)     # (R, T)

    # Mask out lanes of the (possibly) padded last pixel tile.
    lane = jax.lax.broadcasted_iota(jnp.int32, (1, tile), 1)
    valid = (t * tile + lane) < hw               # (1, T) bool

    sel = jnp.logical_and(sub == 1, valid)       # pixels where sub_map == 1
    pos = jnp.logical_and(tgt > 0, sel)          # positive pixels for regression

    # ---- focal loss term at the target class (softmax over the C rows) -----
    m = jnp.max(x, axis=0, keepdims=True)        # (1, T)
    xs = x - m
    ex = jnp.exp(xs)
    se = jnp.sum(ex, axis=0, keepdims=True)      # (1, T) softmax denominator

    cls_ids = jax.lax.broadcasted_iota(jnp.int32, x.shape, 0)
    onehot = (cls_ids == tgt).astype(jnp.float32)          # (C, T)
    xs_t = jnp.sum(onehot * xs, axis=0, keepdims=True)     # shifted logit @ target
    ex_t = jnp.sum(onehot * ex, axis=0, keepdims=True)     # exp(shifted) @ target

    p_t = ex_t / se                                        # softmax prob @ target
    logp_t = xs_t - jnp.log(se)                            # log-softmax @ target
    w = 1.0 - p_t
    weight = w * w if float(gamma) == 2.0 else w ** gamma  # explicit square, no pow
    per_pix = (-alpha) * weight * logp_t                   # (1, T)

    # ---- smooth-L1 regression term over positive pixels --------------------
    d = regp - regt
    ad = jnp.abs(d)
    sl1 = jnp.where(ad < 1.0, 0.5 * d * d, ad - 0.5)       # (R, T)
    sl1 = jnp.where(pos, sl1, 0.0)                         # mask (broadcasts)
    sl1_sum = jnp.sum(sl1, axis=0, keepdims=True)          # (1, T)

    # ---- lane-shaped partial sums (collapsed only once, at finalize) -------
    fc_acc[...] += jnp.where(sel, per_pix, 0.0)
    sel_acc[...] += sel.astype(jnp.float32)
    loc_acc[...] += sl1_sum
    pos_acc[...] += pos.astype(jnp.float32)

    @pl.when(jnp.logical_and(b == nb - 1, t == nt - 1))
    def _finalize():
        fc_num = jnp.sum(fc_acc[...])
        n_sel = jnp.sum(sel_acc[...])
        loc_num = jnp.sum(loc_acc[...])
        n_pos = jnp.sum(pos_acc[...]) * float(num_reg)     # == torch.sum(mask)

        fc = jnp.where(n_sel > 0.0, fc_num / jnp.maximum(n_sel, 1.0), 0.0)
        has_pos = n_pos > 0.0
        loc = jnp.where(has_pos, loc_num / jnp.maximum(n_pos, 1.0), 0.0)
        total = jnp.where(has_pos, 2.0 * fc + loc, fc)

        loss_ref[0, 0] = total
        fc_ref[0, 0] = fc
        loc_ref[0, 0] = loc


def custom_loss(cls_pred, reg_pred, cls_target, reg_target, sub_map,
                alpha=0.25, gamma=2.0, tile=4096):
    """Pallas equivalent of CustomLoss.forward with reduction='mean'."""
    B, C, H, W = cls_pred.shape
    R = reg_pred.shape[1]
    HW = H * W

    # Free contiguous reshapes (no transpose): channel-major, H*W lane-dense.
    logits = cls_pred.reshape(B, C, HW)
    regp = reg_pred.reshape(B, R, HW)
    regt = reg_target.reshape(B, R, HW)
    tgt = cls_target.reshape(B, 1, HW).astype(jnp.int32)
    sub = sub_map.reshape(B, 1, HW).astype(jnp.int32)

    # Pixel tile: multiple of 128 lanes, capped at (rounded-up) HW.  With
    # C=5 / R=4 the double-buffered working set stays well under scoped VMEM
    # on every generation (v5e 16 MiB, v6e/v7x 32 MiB).
    hw_pad = pl.cdiv(HW, 128) * 128
    T = int(min(int(tile), int(hw_pad)))
    T = max(128, (T // 128) * 128)
    nt = pl.cdiv(HW, T)

    kernel = functools.partial(_custom_loss_kernel, alpha=float(alpha),
                               gamma=float(gamma), num_reg=R, hw=HW, tile=T)

    smem_scalar = pl.BlockSpec((1, 1), lambda b, t: (0, 0),
                               memory_space=pltpu.MemorySpace.SMEM)

    loss, fc, loc = pl.pallas_call(
        kernel,
        out_shape=(jax.ShapeDtypeStruct((1, 1), jnp.float32),
                   jax.ShapeDtypeStruct((1, 1), jnp.float32),
                   jax.ShapeDtypeStruct((1, 1), jnp.float32)),
        grid_spec=pltpu.PrefetchScalarGridSpec(
            num_scalar_prefetch=0,
            grid=(B, nt),
            in_specs=[
                pl.BlockSpec((None, C, T), lambda b, t: (b, 0, t)),
                pl.BlockSpec((None, 1, T), lambda b, t: (b, 0, t)),
                pl.BlockSpec((None, 1, T), lambda b, t: (b, 0, t)),
                pl.BlockSpec((None, R, T), lambda b, t: (b, 0, t)),
                pl.BlockSpec((None, R, T), lambda b, t: (b, 0, t)),
            ],
            out_specs=(smem_scalar, smem_scalar, smem_scalar),
            scratch_shapes=[
                pltpu.VMEM((1, T), jnp.float32),   # sum(focal * sel)
                pltpu.VMEM((1, T), jnp.float32),   # sum(sel)
                pltpu.VMEM((1, T), jnp.float32),   # sum(smoothL1 * pos)
                pltpu.VMEM((1, T), jnp.float32),   # sum(pos)
            ]),
        compiler_params=pltpu.CompilerParams(
            # Both axes feed the shared accumulators, so they must stay on one
            # TensorCore (the single pl.when finalize sees all partials).
            # TODO(synk): on v7x, split the batch axis across the two cores with
            # per-core partial sums + a wrapper-side combine for ~2x HBM BW.
            dimension_semantics=("arbitrary", "arbitrary")),
    )(logits, tgt, sub, regp, regt)

    # Mirrors (loss, fc_loss.item(), loc_loss.item())
    return loss[0, 0], fc[0, 0], loc[0, 0]


def _reference(cls_pred, reg_pred, cls_target, reg_target, sub_map, alpha, gamma):
    """Pure-JAX reference of the PyTorch forward (reduction='mean')."""
    B, C, H, W = cls_pred.shape
    R = reg_pred.shape[1]
    x = jnp.transpose(cls_pred, (0, 2, 3, 1)).reshape(-1, C)
    tgt = cls_target.reshape(-1)
    sub = sub_map.reshape(-1)
    p = jax.nn.softmax(x, axis=1)
    logp = jax.nn.log_softmax(x, axis=1)
    onehot = jax.nn.one_hot(tgt, C, dtype=x.dtype)
    focal = -alpha * (1.0 - p) ** gamma * logp
    per_pix = jnp.sum(onehot * focal, axis=1)
    sel = (sub == 1).astype(x.dtype)
    fc = jnp.sum(per_pix * sel) / jnp.sum(sel)
    pos = jnp.logical_and(tgt > 0, sub == 1).astype(x.dtype)
    d = jnp.transpose(reg_pred - reg_target, (0, 2, 3, 1)).reshape(-1, R)
    ad = jnp.abs(d)
    sl1 = jnp.where(ad < 1.0, 0.5 * d * d, ad - 0.5)
    n_pix = jnp.sum(pos) * R
    loc = jnp.where(n_pix > 0, jnp.sum(sl1 * pos[:, None]) / jnp.maximum(n_pix, 1.0), 0.0)
    loss = jnp.where(n_pix > 0, 2.0 * fc + loc, fc)
    return loss, fc, loc


if __name__ == "__main__":
    # config equivalent: {'alpha': 0.25, 'gamma': 2.0, 'reduction': 'mean'}
    alpha, gamma = 0.25, 2.0

    key = jax.random.PRNGKey(0)
    k1, k2, k3, k4, k5 = jax.random.split(key, 5)
    B, C, R, H, W = 2, 5, 4, 16, 16

    cls_pred = jax.random.normal(k1, (B, C, H, W), jnp.float32)      # pred['cls_map']
    reg_pred = jax.random.normal(k2, (B, R, H, W), jnp.float32)      # pred['reg_map']
    reg_target = jax.random.normal(k3, (B, R, H, W), jnp.float32)    # target['reg_map']
    cls_target = jax.random.randint(k4, (B, H, W), 0, C)             # target['cls_map']
    sub_map = jax.random.bernoulli(k5, 0.5, (B, H, W)).astype(jnp.int32)  # target['sub_map']

    # Guarantee at least one selected and one positive pixel (the PyTorch code
    # assumes num > 0 for focal_loss with 'mean' reduction).
    sub_map = sub_map.at[0, 0, 0].set(1)
    cls_target = cls_target.at[0, 0, 0].set(1)

    loss, fc, loc = custom_loss(cls_pred, reg_pred, cls_target, reg_target,
                                sub_map, alpha=alpha, gamma=gamma)
    jax.block_until_ready(loss)

    r_loss, r_fc, r_loc = _reference(cls_pred, reg_pred, cls_target, reg_target,
                                     sub_map, alpha, gamma)
    np.testing.assert_allclose(np.array(loss), np.array(r_loss), rtol=1e-5, atol=1e-6)
    np.testing.assert_allclose(np.array(fc), np.array(r_fc), rtol=1e-5, atol=1e-6)
    np.testing.assert_allclose(np.array(loc), np.array(r_loc), rtol=1e-5, atol=1e-6)

    print("KERNEL_OK")
</pallas_src>

<mosaic_0001>
module attributes {stable_mosaic.version = 11 : i64} {
  func.func @_custom_loss_kernel(%arg0: i32, %arg1: i32, %arg2: memref<1x5x256xf32, #tpu.memory_space<vmem>>, %arg3: memref<1x1x256xi32, #tpu.memory_space<vmem>>, %arg4: memref<1x1x256xi32, #tpu.memory_space<vmem>>, %arg5: memref<1x4x256xf32, #tpu.memory_space<vmem>>, %arg6: memref<1x4x256xf32, #tpu.memory_space<vmem>>, %arg7: memref<1x1xf32, #tpu.memory_space<smem>>, %arg8: memref<1x1xf32, #tpu.memory_space<smem>>, %arg9: memref<1x1xf32, #tpu.memory_space<smem>>, %arg10: memref<1x256xf32, #tpu.memory_space<vmem>>, %arg11: memref<1x256xf32, #tpu.memory_space<vmem>>, %arg12: memref<1x256xf32, #tpu.memory_space<vmem>>, %arg13: memref<1x256xf32, #tpu.memory_space<vmem>>) attributes {dimension_semantics = [#tpu.dimension_semantics<arbitrary>, #tpu.dimension_semantics<arbitrary>], iteration_bounds = array<i64: 2, 1>, scalar_prefetch = 0 : i64, scratch_operands = 4 : i64, tpu.core_type = #tpu.core_type<tc>, window_params = [{transform_indices = @transform_0, window_bounds = array<i64: 1, 5, 256>}, {transform_indices = @transform_1, window_bounds = array<i64: 1, 1, 256>}, {transform_indices = @transform_2, window_bounds = array<i64: 1, 1, 256>}, {transform_indices = @transform_3, window_bounds = array<i64: 1, 4, 256>}, {transform_indices = @transform_4, window_bounds = array<i64: 1, 4, 256>}, {transform_indices = @transform_5, window_bounds = array<i64: 1, 1>}, {transform_indices = @transform_6, window_bounds = array<i64: 1, 1>}, {transform_indices = @transform_7, window_bounds = array<i64: 1, 1>}]} {
    %c0_i32 = arith.constant 0 : i32
    %0 = arith.cmpi eq, %arg0, %c0_i32 : i32
    %c0_i32_0 = arith.constant 0 : i32
    %1 = arith.cmpi eq, %arg1, %c0_i32_0 : i32
    %2 = arith.andi %0, %1 : i1
    %3 = arith.extui %2 : i1 to i32
    %c0_i32_1 = arith.constant 0 : i32
    %4 = arith.cmpi ne, %3, %c0_i32_1 : i32
    scf.if %4 {
      %cst_48 = arith.constant 0.000000e+00 : f32
      %93 = vector.broadcast %cst_48 : f32 to vector<1x256xf32>
      %c0_49 = arith.constant 0 : index
      %c0_50 = arith.constant 0 : index
      %94 = vector.load %arg10[%c0_49, %c0_50] : memref<1x256xf32, #tpu.memory_space<vmem>>, vector<1x256xf32>
      tpu.vector_store %arg10[%c0_49, %c0_50], %93 {strides = array<i32>} : memref<1x256xf32, #tpu.memory_space<vmem>>, vector<1x256xf32>,
      %cst_51 = arith.constant 0.000000e+00 : f32
      %95 = vector.broadcast %cst_51 : f32 to vector<1x256xf32>
      %c0_52 = arith.constant 0 : index
      %c0_53 = arith.constant 0 : index
      %96 = vector.load %arg11[%c0_52, %c0_53] : memref<1x256xf32, #tpu.memory_space<vmem>>, vector<1x256xf32>
      tpu.vector_store %arg11[%c0_52, %c0_53], %95 {strides = array<i32>} : memref<1x256xf32, #tpu.memory_space<vmem>>, vector<1x256xf32>,
      %cst_54 = arith.constant 0.000000e+00 : f32
      %97 = vector.broadcast %cst_54 : f32 to vector<1x256xf32>
      %c0_55 = arith.constant 0 : index
      %c0_56 = arith.constant 0 : index
      %98 = vector.load %arg12[%c0_55, %c0_56] : memref<1x256xf32, #tpu.memory_space<vmem>>, vector<1x256xf32>
      tpu.vector_store %arg12[%c0_55, %c0_56], %97 {strides = array<i32>} : memref<1x256xf32, #tpu.memory_space<vmem>>, vector<1x256xf32>,
      %cst_57 = arith.constant 0.000000e+00 : f32
      %99 = vector.broadcast %cst_57 : f32 to vector<1x256xf32>
      %c0_58 = arith.constant 0 : index
      %c0_59 = arith.constant 0 : index
      %100 = vector.load %arg13[%c0_58, %c0_59] : memref<1x256xf32, #tpu.memory_space<vmem>>, vector<1x256xf32>
      tpu.vector_store %arg13[%c0_58, %c0_59], %99 {strides = array<i32>} : memref<1x256xf32, #tpu.memory_space<vmem>>, vector<1x256xf32>,
    } else {
    }
    %c0 = arith.constant 0 : index
    %c0_2 = arith.constant 0 : index
    %c0_3 = arith.constant 0 : index
    %5 = vector.load %arg2[%c0, %c0_2, %c0_3] : memref<1x5x256xf32, #tpu.memory_space<vmem>>, vector<1x5x256xf32>
    %6 = vector.shape_cast %5 : vector<1x5x256xf32> to vector<5x256xf32>
    %c0_4 = arith.constant 0 : index
    %c0_5 = arith.constant 0 : index
    %c0_6 = arith.constant 0 : index
    %7 = vector.load %arg3[%c0_4, %c0_5, %c0_6] : memref<1x1x256xi32, #tpu.memory_space<vmem>>, vector<1x1x256xi32>
    %8 = vector.shape_cast %7 : vector<1x1x256xi32> to vector<1x256xi32>
    %c0_7 = arith.constant 0 : index
    %c0_8 = arith.constant 0 : index
    %c0_9 = arith.constant 0 : index
    %9 = vector.load %arg4[%c0_7, %c0_8, %c0_9] : memref<1x1x256xi32, #tpu.memory_space<vmem>>, vector<1x1x256xi32>
    %10 = vector.shape_cast %9 : vector<1x1x256xi32> to vector<1x256xi32>
    %c0_10 = arith.constant 0 : index
    %c0_11 = arith.constant 0 : index
    %c0_12 = arith.constant 0 : index
    %11 = vector.load %arg5[%c0_10, %c0_11, %c0_12] : memref<1x4x256xf32, #tpu.memory_space<vmem>>, vector<1x4x256xf32>
    %12 = vector.shape_cast %11 : vector<1x4x256xf32> to vector<4x256xf32>
    %c0_13 = arith.constant 0 : index
    %c0_14 = arith.constant 0 : index
    %c0_15 = arith.constant 0 : index
    %13 = vector.load %arg6[%c0_13, %c0_14, %c0_15] : memref<1x4x256xf32, #tpu.memory_space<vmem>>, vector<1x4x256xf32>
    %14 = vector.shape_cast %13 : vector<1x4x256xf32> to vector<4x256xf32>
    %15 = tpu.iota {dimensions = array<i32: 1>} : vector<1x256xi32>
    %c256_i32 = arith.constant 256 : i32
    %16 = arith.muli %arg1, %c256_i32 : i32
    %17 = vector.broadcast %16 : i32 to vector<1x256xi32>
    %18 = arith.addi %17, %15 : vector<1x256xi32>
    %c256_i32_16 = arith.constant 256 : i32
    %19 = vector.broadcast %c256_i32_16 : i32 to vector<1x256xi32>
    %20 = arith.cmpi slt, %18, %19 : vector<1x256xi32>
    %c1_i32 = arith.constant 1 : i32
    %21 = vector.broadcast %c1_i32 : i32 to vector<1x256xi32>
    %22 = arith.cmpi eq, %10, %21 : vector<1x256xi32>
    %23 = arith.andi %22, %20 : vector<1x256xi1>
    %c0_i32_17 = arith.constant 0 : i32
    %24 = vector.broadcast %c0_i32_17 : i32 to vector<1x256xi32>
    %25 = arith.cmpi sgt, %8, %24 : vector<1x256xi32>
    %26 = arith.andi %25, %23 : vector<1x256xi1>
    %cst = arith.constant dense<0xFF800000> : vector<256xf32>
    %27 = vector.multi_reduction <maximumf>, %6, %cst [0] : vector<5x256xf32> to vector<256xf32>
    %28 = vector.shape_cast %27 : vector<256xf32> to vector<1x256xf32>
    %29 = vector.broadcast %28 : vector<1x256xf32> to vector<5x256xf32>
    %30 = arith.subf %6, %29 : vector<5x256xf32>
    %31 = math.exp %30 : vector<5x256xf32>
    %cst_18 = arith.constant dense<0.000000e+00> : vector<256xf32>
    %32 = vector.multi_reduction <add>, %31, %cst_18 [0] : vector<5x256xf32> to vector<256xf32>
    %33 = vector.shape_cast %32 : vector<256xf32> to vector<1x256xf32>
    %34 = tpu.iota {dimensions = array<i32: 0>} : vector<5x256xi32>
    %35 = vector.broadcast %8 : vector<1x256xi32> to vector<5x256xi32>
    %36 = arith.cmpi eq, %34, %35 : vector<5x256xi32>
    %37 = arith.extui %36 : vector<5x256xi1> to vector<5x256xi32>
    %38 = arith.sitofp %37 : vector<5x256xi32> to vector<5x256xf32>
    %39 = arith.mulf %38, %30 : vector<5x256xf32>
    %cst_19 = arith.constant dense<0.000000e+00> : vector<256xf32>
    %40 = vector.multi_reduction <add>, %39, %cst_19 [0] : vector<5x256xf32> to vector<256xf32>
    %41 = vector.shape_cast %40 : vector<256xf32> to vector<1x256xf32>
    %42 = arith.mulf %38, %31 : vector<5x256xf32>
    %cst_20 = arith.constant dense<0.000000e+00> : vector<256xf32>
    %43 = vector.multi_reduction <add>, %42, %cst_20 [0] : vector<5x256xf32> to vector<256xf32>
    %44 = vector.shape_cast %43 : vector<256xf32> to vector<1x256xf32>
    %45 = arith.divf %44, %33 : vector<1x256xf32>
    %46 = math.log %33 : vector<1x256xf32>
    %47 = arith.subf %41, %46 : vector<1x256xf32>
    %cst_21 = arith.constant 1.000000e+00 : f32
    %48 = vector.broadcast %cst_21 : f32 to vector<1x256xf32>
    %49 = arith.subf %48, %45 : vector<1x256xf32>
    %50 = arith.mulf %49, %49 : vector<1x256xf32>
    %cst_22 = arith.constant -2.500000e-01 : f32
    %51 = vector.broadcast %cst_22 : f32 to vector<1x256xf32>
    %52 = arith.mulf %51, %50 : vector<1x256xf32>
    %53 = arith.mulf %52, %47 : vector<1x256xf32>
    %54 = arith.subf %12, %14 : vector<4x256xf32>
    %55 = math.absf %54 : vector<4x256xf32>
    %cst_23 = arith.constant 1.000000e+00 : f32
    %56 = vector.broadcast %cst_23 : f32 to vector<4x256xf32>
    %57 = arith.cmpf olt, %55, %56 : vector<4x256xf32>
    %cst_24 = arith.constant 5.000000e-01 : f32
    %58 = vector.broadcast %cst_24 : f32 to vector<4x256xf32>
    %59 = arith.mulf %58, %54 : vector<4x256xf32>
    %60 = arith.mulf %59, %54 : vector<4x256xf32>
    %cst_25 = arith.constant 5.000000e-01 : f32
    %61 = vector.broadcast %cst_25 : f32 to vector<4x256xf32>
    %62 = arith.subf %55, %61 : vector<4x256xf32>
    %63 = arith.select %57, %60, %62 : vector<4x256xi1>, vector<4x256xf32>
    %cst_26 = arith.constant 0.000000e+00 : f32
    %64 = vector.shape_cast %26 : vector<1x256xi1> to vector<1x256xi1>
    %65 = vector.broadcast %64 : vector<1x256xi1> to vector<4x256xi1>
    %66 = vector.broadcast %cst_26 : f32 to vector<4x256xf32>
    %67 = arith.select %65, %63, %66 : vector<4x256xi1>, vector<4x256xf32>
    %cst_27 = arith.constant dense<0.000000e+00> : vector<256xf32>
    %68 = vector.multi_reduction <add>, %67, %cst_27 [0] : vector<4x256xf32> to vector<256xf32>
    %69 = vector.shape_cast %68 : vector<256xf32> to vector<1x256xf32>
    %c0_28 = arith.constant 0 : index
    %c0_29 = arith.constant 0 : index
    %70 = vector.load %arg10[%c0_28, %c0_29] : memref<1x256xf32, #tpu.memory_space<vmem>>, vector<1x256xf32>
    %cst_30 = arith.constant 0.000000e+00 : f32
    %71 = vector.broadcast %cst_30 : f32 to vector<1x256xf32>
    %72 = arith.select %23, %53, %71 : vector<1x256xi1>, vector<1x256xf32>
    %73 = arith.addf %70, %72 : vector<1x256xf32>
    %c0_31 = arith.constant 0 : index
    %c0_32 = arith.constant 0 : index
    %74 = vector.load %arg10[%c0_31, %c0_32] : memref<1x256xf32, #tpu.memory_space<vmem>>, vector<1x256xf32>
    tpu.vector_store %arg10[%c0_31, %c0_32], %73 {strides = array<i32>} : memref<1x256xf32, #tpu.memory_space<vmem>>, vector<1x256xf32>,
    %c0_33 = arith.constant 0 : index
    %c0_34 = arith.constant 0 : index
    %75 = vector.load %arg11[%c0_33, %c0_34] : memref<1x256xf32, #tpu.memory_space<vmem>>, vector<1x256xf32>
    %76 = arith.extui %23 : vector<1x256xi1> to vector<1x256xi32>
    %77 = arith.sitofp %76 : vector<1x256xi32> to vector<1x256xf32>
    %78 = arith.addf %75, %77 : vector<1x256xf32>
    %c0_35 = arith.constant 0 : index
    %c0_36 = arith.constant 0 : index
    %79 = vector.load %arg11[%c0_35, %c0_36] : memref<1x256xf32, #tpu.memory_space<vmem>>, vector<1x256xf32>
    tpu.vector_store %arg11[%c0_35, %c0_36], %78 {strides = array<i32>} : memref<1x256xf32, #tpu.memory_space<vmem>>, vector<1x256xf32>,
    %c0_37 = arith.constant 0 : index
    %c0_38 = arith.constant 0 : index
    %80 = vector.load %arg12[%c0_37, %c0_38] : memref<1x256xf32, #tpu.memory_space<vmem>>, vector<1x256xf32>
    %81 = arith.addf %80, %69 : vector<1x256xf32>
    %c0_39 = arith.constant 0 : index
    %c0_40 = arith.constant 0 : index
    %82 = vector.load %arg12[%c0_39, %c0_40] : memref<1x256xf32, #tpu.memory_space<vmem>>, vector<1x256xf32>
    tpu.vector_store %arg12[%c0_39, %c0_40], %81 {strides = array<i32>} : memref<1x256xf32, #tpu.memory_space<vmem>>, vector<1x256xf32>,
    %c0_41 = arith.constant 0 : index
    %c0_42 = arith.constant 0 : index
    %83 = vector.load %arg13[%c0_41, %c0_42] : memref<1x256xf32, #tpu.memory_space<vmem>>, vector<1x256xf32>
    %84 = arith.extui %26 : vector<1x256xi1> to vector<1x256xi32>
    %85 = arith.sitofp %84 : vector<1x256xi32> to vector<1x256xf32>
    %86 = arith.addf %83, %85 : vector<1x256xf32>
    %c0_43 = arith.constant 0 : index
    %c0_44 = arith.constant 0 : index
    %87 = vector.load %arg13[%c0_43, %c0_44] : memref<1x256xf32, #tpu.memory_space<vmem>>, vector<1x256xf32>
    tpu.vector_store %arg13[%c0_43, %c0_44], %86 {strides = array<i32>} : memref<1x256xf32, #tpu.memory_space<vmem>>, vector<1x256xf32>,
    %c1_i32_45 = arith.constant 1 : i32
    %88 = arith.cmpi eq, %arg0, %c1_i32_45 : i32
    %c0_i32_46 = arith.constant 0 : i32
    %89 = arith.cmpi eq, %arg1, %c0_i32_46 : i32
    %90 = arith.andi %88, %89 : i1
    %91 = arith.extui %90 : i1 to i32
    %c0_i32_47 = arith.constant 0 : i32
    %92 = arith.cmpi ne, %91, %c0_i32_47 : i32
    scf.if %92 {
      %c0_48 = arith.constant 0 : index
      %c0_49 = arith.constant 0 : index
      %93 = vector.load %arg10[%c0_48, %c0_49] : memref<1x256xf32, #tpu.memory_space<vmem>>, vector<1x256xf32>
      %94 = vector.shape_cast %93 : vector<1x256xf32> to vector<1x1x256xf32>
      %cst_50 = arith.constant dense<0.000000e+00> : vector<1xf32>
      %95 = vector.multi_reduction <add>, %94, %cst_50 [1, 2] : vector<1x1x256xf32> to vector<1xf32>
      %96 = vector.shape_cast %95 : vector<1xf32> to vector<1x1x1xf32>
      %97 = vector.extract %96[0, 0, 0] : f32 from vector<1x1x1xf32>
      %c0_51 = arith.constant 0 : index
      %c0_52 = arith.constant 0 : index
      %98 = vector.load %arg11[%c0_51, %c0_52] : memref<1x256xf32, #tpu.memory_space<vmem>>, vector<1x256xf32>
      %99 = vector.shape_cast %98 : vector<1x256xf32> to vector<1x1x256xf32>
      %cst_53 = arith.constant dense<0.000000e+00> : vector<1xf32>
      %100 = vector.multi_reduction <add>, %99, %cst_53 [1, 2] : vector<1x1x256xf32> to vector<1xf32>
      %101 = vector.shape_cast %100 : vector<1xf32> to vector<1x1x1xf32>
      %102 = vector.extract %101[0, 0, 0] : f32 from vector<1x1x1xf32>
      %c0_54 = arith.constant 0 : index
      %c0_55 = arith.constant 0 : index
      %103 = vector.load %arg12[%c0_54, %c0_55] : memref<1x256xf32, #tpu.memory_space<vmem>>, vector<1x256xf32>
      %104 = vector.shape_cast %103 : vector<1x256xf32> to vector<1x1x256xf32>
      %cst_56 = arith.constant dense<0.000000e+00> : vector<1xf32>
      %105 = vector.multi_reduction <add>, %104, %cst_56 [1, 2] : vector<1x1x256xf32> to vector<1xf32>
      %106 = vector.shape_cast %105 : vector<1xf32> to vector<1x1x1xf32>
      %107 = vector.extract %106[0, 0, 0] : f32 from vector<1x1x1xf32>
      %c0_57 = arith.constant 0 : index
      %c0_58 = arith.constant 0 : index
      %108 = vector.load %arg13[%c0_57, %c0_58] : memref<1x256xf32, #tpu.memory_space<vmem>>, vector<1x256xf32>
      %109 = vector.shape_cast %108 : vector<1x256xf32> to vector<1x1x256xf32>
      %cst_59 = arith.constant dense<0.000000e+00> : vector<1xf32>
      %110 = vector.multi_reduction <add>, %109, %cst_59 [1, 2] : vector<1x1x256xf32> to vector<1xf32>
      %111 = vector.shape_cast %110 : vector<1xf32> to vector<1x1x1xf32>
      %112 = vector.extract %111[0, 0, 0] : f32 from vector<1x1x1xf32>
      %cst_60 = arith.constant 4.000000e+00 : f32
      %113 = arith.mulf %112, %cst_60 : f32
      %cst_61 = arith.constant 0.000000e+00 : f32
      %114 = arith.cmpf ogt, %102, %cst_61 : f32
      %cst_62 = arith.constant 1.000000e+00 : f32
      %115 = arith.maximumf %102, %cst_62 : f32
      %116 = arith.divf %97, %115 : f32
      %cst_63 = arith.constant 0.000000e+00 : f32
      %117 = arith.select %114, %116, %cst_63 : f32
      %cst_64 = arith.constant 0.000000e+00 : f32
      %118 = arith.cmpf ogt, %113, %cst_64 : f32
      %cst_65 = arith.constant 1.000000e+00 : f32
      %119 = arith.maximumf %113, %cst_65 : f32
      %120 = arith.divf %107, %119 : f32
      %cst_66 = arith.constant 0.000000e+00 : f32
      %121 = arith.select %118, %120, %cst_66 : f32
      %cst_67 = arith.constant 2.000000e+00 : f32
      %122 = arith.mulf %cst_67, %117 : f32
      %123 = arith.addf %122, %121 : f32
      %124 = arith.select %118, %123, %117 : f32
      %c0_68 = arith.constant 0 : index
      %c0_69 = arith.constant 0 : index
      %125 = memref.load %arg7[%c0_68, %c0_69] : memref<1x1xf32, #tpu.memory_space<smem>>
      memref.store %124, %arg7[%c0_68, %c0_69] : memref<1x1xf32, #tpu.memory_space<smem>>
      %c0_70 = arith.constant 0 : index
      %c0_71 = arith.constant 0 : index
      %126 = memref.load %arg8[%c0_70, %c0_71] : memref<1x1xf32, #tpu.memory_space<smem>>
      memref.store %117, %arg8[%c0_70, %c0_71] : memref<1x1xf32, #tpu.memory_space<smem>>
      %c0_72 = arith.constant 0 : index
      %c0_73 = arith.constant 0 : index
      %127 = memref.load %arg9[%c0_72, %c0_73] : memref<1x1xf32, #tpu.memory_space<smem>>
      memref.store %121, %arg9[%c0_72, %c0_73] : memref<1x1xf32, #tpu.memory_space<smem>>
    } else {
    }
    return
  }
  func.func @transform_0(%arg0: i32, %arg1: i32) -> (i32, i32, i32) {
    %c0_i32 = arith.constant 0 : i32
    %c0_i32_0 = arith.constant 0 : i32
    return %arg0, %c0_i32, %arg1 : i32, i32, i32
  }
  func.func @transform_1(%arg0: i32, %arg1: i32) -> (i32, i32, i32) {
    %c0_i32 = arith.constant 0 : i32
    %c0_i32_0 = arith.constant 0 : i32
    return %arg0, %c0_i32, %arg1 : i32, i32, i32
  }
  func.func @transform_2(%arg0: i32, %arg1: i32) -> (i32, i32, i32) {
    %c0_i32 = arith.constant 0 : i32
    %c0_i32_0 = arith.constant 0 : i32
    return %arg0, %c0_i32, %arg1 : i32, i32, i32
  }
  func.func @transform_3(%arg0: i32, %arg1: i32) -> (i32, i32, i32) {
    %c0_i32 = arith.constant 0 : i32
    %c0_i32_0 = arith.constant 0 : i32
    return %arg0, %c0_i32, %arg1 : i32, i32, i32
  }
  func.func @transform_4(%arg0: i32, %arg1: i32) -> (i32, i32, i32) {
    %c0_i32 = arith.constant 0 : i32
    %c0_i32_0 = arith.constant 0 : i32
    return %arg0, %c0_i32, %arg1 : i32, i32, i32
  }
  func.func @transform_5(%arg0: i32, %arg1: i32) -> (i32, i32) {
    %c0_i32 = arith.constant 0 : i32
    %c0_i32_0 = arith.constant 0 : i32
    %c0_i32_1 = arith.constant 0 : i32
    return %c0_i32, %c0_i32_0 : i32, i32
  }
  func.func @transform_6(%arg0: i32, %arg1: i32) -> (i32, i32) {
    %c0_i32 = arith.constant 0 : i32
    %c0_i32_0 = arith.constant 0 : i32
    %c0_i32_1 = arith.constant 0 : i32
    return %c0_i32, %c0_i32_0 : i32, i32
  }
  func.func @transform_7(%arg0: i32, %arg1: i32) -> (i32, i32) {
    %c0_i32 = arith.constant 0 : i32
    %c0_i32_0 = arith.constant 0 : i32
    %c0_i32_1 = arith.constant 0 : i32
    return %c0_i32, %c0_i32_0 : i32, i32
  }
}

</mosaic_0001>

<llo_original>
// kernel: tpu_custom_call.1
$region0: #{tpu_custom_call.1}
  #allocation0 [shape = 'u32[]', space=smem, size = 0x4, offset = 0x4, fixed_abs, tag = 'smem constant byte address 0x4 - core index']
  #allocation1 [shape = 'u32[144,128]{1,0:T(1,128)}', space=vmem, size = 0x12000, scoped, tag = 'internal scratch']
  #allocation2 [shape = 'f32[1,256]{1,0:T(1,128)}', space=vmem, size = 0x400, scoped, tag = 'scratch operand']
  #allocation3 [shape = 'f32[1,256]{1,0:T(1,128)}', space=vmem, size = 0x400, scoped, tag = 'scratch operand']
  #allocation4 [shape = 'f32[1,256]{1,0:T(1,128)}', space=vmem, size = 0x400, scoped, tag = 'scratch operand']
  #allocation5 [shape = 'f32[1,256]{1,0:T(1,128)}', space=vmem, size = 0x400, scoped, tag = 'scratch operand']
  %s0 = inlined_call_operand.vmem [shape: f32[2,5,256], index: 0, kind: input, shape index: {}]
  %s1 = inlined_call_operand.vmem [shape: s32[2,1,256], index: 1, kind: input, shape index: {}]
  %s2 = inlined_call_operand.vmem [shape: s32[2,1,256], index: 2, kind: input, shape index: {}]
  %s3 = inlined_call_operand.vmem [shape: f32[2,4,256], index: 3, kind: input, shape index: {}]
  %s4 = inlined_call_operand.vmem [shape: f32[2,4,256], index: 4, kind: input, shape index: {}]
  %s5 = inlined_call_operand.hbm [shape: f32[1,1], index: 5, kind: output, shape index: {0}]
  %s6 = inlined_call_operand.hbm [shape: f32[1,1], index: 6, kind: output, shape index: {1}]
  %s7 = inlined_call_operand.hbm [shape: f32[1,1], index: 7, kind: output, shape index: {2}]
  %8 = xla_tuple %s5, %s6, %s7
  %s9 = sld [smem:[#allocation0]]
  $region77: #{tpu_custom_call.1} parent=0
    _
  %s11 = ssub.s32 1, %s9
  %s12 = scalar_select 0, %s11, %s9
  $region1: #{tpu_custom_call.1} parent=0
    #allocation6 [shape = 'u8[512]{0}', space=smem, size = 0x200, scoped, tag = 'output window, operand 0, single buffered']
    #allocation7 [shape = 's32[2]{0}', space=sflag, size = 0x8, scoped, tag = 'scoped memory for tpu_custom_call.1']
    #allocation8 [shape = 'u8[512]{0}', space=smem, size = 0x200, scoped, tag = 'output window, operand 1, single buffered']
    #allocation9 [shape = 's32[1]{0}', space=sflag, size = 0x4, scoped, tag = 'scoped memory for tpu_custom_call.1']
    #allocation10 [shape = 'u8[512]{0}', space=smem, size = 0x200, scoped, tag = 'output window, operand 2, single buffered']
    %13 = vsyncpa [#allocation7], 0
    %14 = vsyncpa [#allocation9], 0
    loop: start=0, step=1, limit=4
    $region2: #{tpu_custom_call.1} parent=1 // loop_pre_header
      _
    $region3: #{tpu_custom_call.1} parent=1 // loop_header
      %s16 = sphi 0, %s20
      %p17 = scmp.ge.s32.totalorder %s16, 4
      %s23 = sphi 0, %s35
      %s24 = sphi 0, %s31
      %s25 = sphi 0, %s23
      %s26 = sphi 0, %s24
      %s27 = sphi 0, %s25
      %s28 = sphi 0, %s26
      %s40 = sphi 0, %s42
      %s43 = sphi 0, %s40
      %s44 = sphi 0, %s43
      %s60 = sphi 0, %s44
      %s68 = sphi 0, %s70
      %s71 = sphi 0, %s68
      %s72 = sphi 0, %s71
      %s88 = sphi 0, %s72
      %s96 = sphi 0, %s98
      %s99 = sphi 0, %s96
      %s100 = sphi 0, %s99
      %s116 = sphi 0, %s100
      %s124 = sphi 0, %s126
      %s127 = sphi 0, %s124
      %s128 = sphi 0, %s127
      %s144 = sphi 0, %s128
      %s152 = sphi 0, %s154
      %s155 = sphi 0, %s152
      %s156 = sphi 0, %s155
      %s172 = sphi 0, %s156
      %s176 = sphi 0, %s176
      %s178 = sphi 0, %s176
      %s179 = sphi 0, %s178
      %s193 = sphi 0, %s179
      %s197 = sphi 0, %s197
      %s199 = sphi 0, %s197
      %s200 = sphi 0, %s199
      %s214 = sphi 0, %s200
      %s218 = sphi 0, %s218
      %s220 = sphi 0, %s218
      %s221 = sphi 0, %s220
      %s235 = sphi 0, %s221
    $region4: #{tpu_custom_call.1} parent=1 // loop_header_branch
      %19 = sbr.rel (%p17) target = $region8
    $region5: #{tpu_custom_call.1} parent=1 // loop_body
      %s21 = ssub.s32 %s16, 1
      %s22 = ssub.s32 %s16, 2
      %s29 = sadd.s32 1, %s24
      %p30 = scmp.ge.s32.totalorder %s29, 1
      %s31 = scalar_select %p30, 0, %s29
      %s32 = sadd.s32 1, %s23
      %s33 = scalar_select %p30, %s32, %s23
      %p34 = scmp.ge.s32.totalorder %s33, 2
      %s35 = scalar_select %p34, 0, %s33
      %s36 = ssub.s32 %s23, %s35
      %s37 = ssub.s32 %s24, %s31
      %s38 = sor.u32 %s36, %s37
      %p39 = scmp.eq.s32.totalorder %s38, 0
      %s41 = sadd.s32 %s40, 1
      %s42 = scalar_select %p39, %s40, %s41
      %p45 = pneg %p39
      %p46 = scmp.eq.s32.totalorder %s16, 1
      %p47 = por %p45, %p46
      %p48 = scmp.ne.s32.totalorder %s40, %s43
      %p49 = scmp.eq.s32.totalorder %s16, 0
      %p50 = por %p48, %p49
      %p51 = scmp.ne.s32.totalorder %s40, %s43
      %p52 = scmp.eq.s32.totalorder %s21, 1
      %p53 = por %p51, %p52
      %p54 = scmp.ne.s32.totalorder %s43, %s44
      %p55 = scmp.eq.s32.totalorder %s21, 0
      %p56 = por %p54, %p55
      %p57 = scmp.ne.s32.totalorder %s43, %s44
      %p58 = scmp.eq.s32.totalorder %s22, 1
      %p59 = por %p57, %p58
      %p61 = scmp.ne.s32.totalorder %s44, %s60
      %p62 = scmp.eq.s32.totalorder %s22, 0
      %p63 = por %p61, %p62
      %s64 = ssub.s32 %s23, %s35
      %s65 = ssub.s32 %s24, %s31
      %s66 = sor.u32 %s64, %s65
      %p67 = scmp.eq.s32.totalorder %s66, 0
      %s69 = sadd.s32 %s68, 1
      %s70 = scalar_select %p67, %s68, %s69
      %p73 = pneg %p67
      %p74 = scmp.eq.s32.totalorder %s16, 1
      %p75 = por %p73, %p74
      %p76 = scmp.ne.s32.totalorder %s68, %s71
      %p77 = scmp.eq.s32.totalorder %s16, 0
      %p78 = por %p76, %p77
      %p79 = scmp.ne.s32.totalorder %s68, %s71
      %p80 = scmp.eq.s32.totalorder %s21, 1
      %p81 = por %p79, %p80
      %p82 = scmp.ne.s32.totalorder %s71, %s72
      %p83 = scmp.eq.s32.totalorder %s21, 0
      %p84 = por %p82, %p83
      %p85 = scmp.ne.s32.totalorder %s71, %s72
      %p86 = scmp.eq.s32.totalorder %s22, 1
      %p87 = por %p85, %p86
      %p89 = scmp.ne.s32.totalorder %s72, %s88
      %p90 = scmp.eq.s32.totalorder %s22, 0
      %p91 = por %p89, %p90
      %s92 = ssub.s32 %s23, %s35
      %s93 = ssub.s32 %s24, %s31
      %s94 = sor.u32 %s92, %s93
      %p95 = scmp.eq.s32.totalorder %s94, 0
      %s97 = sadd.s32 %s96, 1
      %s98 = scalar_select %p95, %s96, %s97
      %p101 = pneg %p95
      %p102 = scmp.eq.s32.totalorder %s16, 1
      %p103 = por %p101, %p102
      %p104 = scmp.ne.s32.totalorder %s96, %s99
      %p105 = scmp.eq.s32.totalorder %s16, 0
      %p106 = por %p104, %p105
      %p107 = scmp.ne.s32.totalorder %s96, %s99
      %p108 = scmp.eq.s32.totalorder %s21, 1
      %p109 = por %p107, %p108
      %p110 = scmp.ne.s32.totalorder %s99, %s100
      %p111 = scmp.eq.s32.totalorder %s21, 0
      %p112 = por %p110, %p111
      %p113 = scmp.ne.s32.totalorder %s99, %s100
      %p114 = scmp.eq.s32.totalorder %s22, 1
      %p115 = por %p113, %p114
      %p117 = scmp.ne.s32.totalorder %s100, %s116
      %p118 = scmp.eq.s32.totalorder %s22, 0
      %p119 = por %p117, %p118
      %s120 = ssub.s32 %s23, %s35
      %s121 = ssub.s32 %s24, %s31
      %s122 = sor.u32 %s120, %s121
      %p123 = scmp.eq.s32.totalorder %s122, 0
      %s125 = sadd.s32 %s124, 1
      %s126 = scalar_select %p123, %s124, %s125
      %p129 = pneg %p123
      %p130 = scmp.eq.s32.totalorder %s16, 1
      %p131 = por %p129, %p130
      %p132 = scmp.ne.s32.totalorder %s124, %s127
      %p133 = scmp.eq.s32.totalorder %s16, 0
      %p134 = por %p132, %p133
      %p135 = scmp.ne.s32.totalorder %s124, %s127
      %p136 = scmp.eq.s32.totalorder %s21, 1
      %p137 = por %p135, %p136
      %p138 = scmp.ne.s32.totalorder %s127, %s128
      %p139 = scmp.eq.s32.totalorder %s21, 0
      %p140 = por %p138, %p139
      %p141 = scmp.ne.s32.totalorder %s127, %s128
      %p142 = scmp.eq.s32.totalorder %s22, 1
      %p143 = por %p141, %p142
      %p145 = scmp.ne.s32.totalorder %s128, %s144
      %p146 = scmp.eq.s32.totalorder %s22, 0
      %p147 = por %p145, %p146
      %s148 = ssub.s32 %s23, %s35
      %s149 = ssub.s32 %s24, %s31
      %s150 = sor.u32 %s148, %s149
      %p151 = scmp.eq.s32.totalorder %s150, 0
      %s153 = sadd.s32 %s152, 1
      %s154 = scalar_select %p151, %s152, %s153
      %p157 = pneg %p151
      %p158 = scmp.eq.s32.totalorder %s16, 1
      %p159 = por %p157, %p158
      %p160 = scmp.ne.s32.totalorder %s152, %s155
      %p161 = scmp.eq.s32.totalorder %s16, 0
      %p162 = por %p160, %p161
      %p163 = scmp.ne.s32.totalorder %s152, %s155
      %p164 = scmp.eq.s32.totalorder %s21, 1
      %p165 = por %p163, %p164
      %p166 = scmp.ne.s32.totalorder %s155, %s156
      %p167 = scmp.eq.s32.totalorder %s21, 0
      %p168 = por %p166, %p167
      %p169 = scmp.ne.s32.totalorder %s155, %s156
      %p170 = scmp.eq.s32.totalorder %s22, 1
      %p171 = por %p169, %p170
      %p173 = scmp.ne.s32.totalorder %s156, %s172
      %p174 = scmp.eq.s32.totalorder %s22, 0
      %p175 = por %p173, %p174
      %s177 = sadd.s32 %s176, 1
      %p180 = scmp.eq.s32.totalorder %s16, 1
      %p181 = scmp.ne.s32.totalorder %s176, %s178
      %p182 = scmp.eq.s32.totalorder %s16, 0
      %p183 = por %p181, %p182
      %p184 = scmp.ne.s32.totalorder %s176, %s178
      %p185 = scmp.eq.s32.totalorder %s21, 1
      %p186 = por %p184, %p185
      %p187 = scmp.ne.s32.totalorder %s178, %s179
      %p188 = scmp.eq.s32.totalorder %s21, 0
      %p189 = por %p187, %p188
      %p190 = scmp.ne.s32.totalorder %s178, %s179
      %p191 = scmp.eq.s32.totalorder %s22, 1
      %p192 = por %p190, %p191
      %p194 = scmp.ne.s32.totalorder %s179, %s193
      %p195 = scmp.eq.s32.totalorder %s22, 0
      %p196 = por %p194, %p195
      %s198 = sadd.s32 %s197, 1
      %p201 = scmp.eq.s32.totalorder %s16, 1
      %p202 = scmp.ne.s32.totalorder %s197, %s199
      %p203 = scmp.eq.s32.totalorder %s16, 0
      %p204 = por %p202, %p203
      %p205 = scmp.ne.s32.totalorder %s197, %s199
      %p206 = scmp.eq.s32.totalorder %s21, 1
      %p207 = por %p205, %p206
      %p208 = scmp.ne.s32.totalorder %s199, %s200
      %p209 = scmp.eq.s32.totalorder %s21, 0
      %p210 = por %p208, %p209
      %p211 = scmp.ne.s32.totalorder %s199, %s200
      %p212 = scmp.eq.s32.totalorder %s22, 1
      %p213 = por %p211, %p212
      %p215 = scmp.ne.s32.totalorder %s200, %s214
      %p216 = scmp.eq.s32.totalorder %s22, 0
      %p217 = por %p215, %p216
      %s219 = sadd.s32 %s218, 1
      %p222 = scmp.eq.s32.totalorder %s16, 1
      %p223 = scmp.ne.s32.totalorder %s218, %s220
      %p224 = scmp.eq.s32.totalorder %s16, 0
      %p225 = por %p223, %p224
      %p226 = scmp.ne.s32.totalorder %s218, %s220
      %p227 = scmp.eq.s32.totalorder %s21, 1
      %p228 = por %p226, %p227
      %p229 = scmp.ne.s32.totalorder %s220, %s221
      %p230 = scmp.eq.s32.totalorder %s21, 0
      %p231 = por %p229, %p230
      %p232 = scmp.ne.s32.totalorder %s220, %s221
      %p233 = scmp.eq.s32.totalorder %s22, 1
      %p234 = por %p232, %p233
      %p236 = scmp.ne.s32.totalorder %s221, %s235
      %p237 = scmp.eq.s32.totalorder %s22, 0
      %p238 = por %p236, %p237
      %p239 = scmp.le.s32.totalorder 1, %s16
      %p240 = scmp.lt.s32.totalorder %s16, 3
      %p241 = pnand %p239, %p240
      %p242 = pneg %p241
      // Predicated region
      $region9: #{tpu_custom_call.1} parent=5 // pred_check
        _
      $region10: #{tpu_custom_call.1} parent=5 // pred_check_branch
        %244 = sbr.rel (%p241) target = $region12
      $region11: #{tpu_custom_call.1} parent=5 // pred_region
        %s245 = ssub.s32 %s16, 1
      $region12: #{tpu_custom_call.1} parent=5 // pred_fallthru
        _
      %p246 = scmp.lt.s32.totalorder %s16, 2
      // Predicated region
      $region13: #{tpu_custom_call.1} parent=5 // pred_check
        %p247 = pneg %p246
      $region14: #{tpu_custom_call.1} parent=5 // pred_check_branch
        %249 = sbr.rel (%p247) target = $region16
      $region15: #{tpu_custom_call.1} parent=5 // pred_region
        // Predicated region
        $region17: #{tpu_custom_call.1} parent=15 // pred_check
          %p250 = pneg %p50
        $region18: #{tpu_custom_call.1} parent=15 // pred_check_branch
          %252 = sbr.rel (%p250) target = $region20
        $region19: #{tpu_custom_call.1} parent=15 // pred_region
          %s253 = smul.u32 2, %s24
          %p254 = scmp.lt.s32.totalorder %s23, 1
          %s255 = scalar_select %p254, %s23, 1
          %p256 = scmp.lt.s32.totalorder %s253, 1
          %s257 = scalar_select %p256, %s253, 1
          %s258 = smul.addr %s255, 2
          %s259 = sadd.s32 %s257, %s258
          %s260 = smul.addr %s259, 8
          %s261 = scalar_lea.vmem %s0, %s260
          %s262 = smul.u32 2, %s24
        $region20: #{tpu_custom_call.1} parent=15 // pred_fallthru
          _
        // Predicated region
        $region21: #{tpu_custom_call.1} parent=15 // pred_check
          %p263 = pneg %p78
        $region22: #{tpu_custom_call.1} parent=15 // pred_check_branch
          %265 = sbr.rel (%p263) target = $region24
        $region23: #{tpu_custom_call.1} parent=15 // pred_region
          %s266 = smul.u32 2, %s24
          %p267 = scmp.lt.s32.totalorder %s23, 1
          %s268 = scalar_select %p267, %s23, 1
          %p269 = scmp.lt.s32.totalorder %s266, 1
          %s270 = scalar_select %p269, %s266, 1
          %s271 = smul.addr %s268, 2
          %s272 = sadd.s32 %s270, %s271
          %s273 = scalar_lea.vmem %s1, %s272
          %s274 = smul.u32 2, %s24
        $region24: #{tpu_custom_call.1} parent=15 // pred_fallthru
          _
        // Predicated region
        $region25: #{tpu_custom_call.1} parent=15 // pred_check
          %p275 = pneg %p106
        $region26: #{tpu_custom_call.1} parent=15 // pred_check_branch
          %277 = sbr.rel (%p275) target = $region28
        $region27: #{tpu_custom_call.1} parent=15 // pred_region
          %s278 = smul.u32 2, %s24
          %p279 = scmp.lt.s32.totalorder %s23, 1
          %s280 = scalar_select %p279, %s23, 1
          %p281 = scmp.lt.s32.totalorder %s278, 1
          %s282 = scalar_select %p281, %s278, 1
          %s283 = smul.addr %s280, 2
          %s284 = sadd.s32 %s282, %s283
          %s285 = scalar_lea.vmem %s2, %s284
          %s286 = smul.u32 2, %s24
        $region28: #{tpu_custom_call.1} parent=15 // pred_fallthru
          _
        // Predicated region
        $region29: #{tpu_custom_call.1} parent=15 // pred_check
          %p287 = pneg %p134
        $region30: #{tpu_custom_call.1} parent=15 // pred_check_branch
          %289 = sbr.rel (%p287) target = $region32
        $region31: #{tpu_custom_call.1} parent=15 // pred_region
          %s290 = smul.u32 2, %s24
          %p291 = scmp.lt.s32.totalorder %s23, 1
          %s292 = scalar_select %p291, %s23, 1
          %p293 = scmp.lt.s32.totalorder %s290, 1
          %s294 = scalar_select %p293, %s290, 1
          %s295 = smul.addr %s292, 2
          %s296 = sadd.s32 %s294, %s295
          %s297 = smul.addr %s296, 4
          %s298 = scalar_lea.vmem %s3, %s297
          %s299 = smul.u32 2, %s24
        $region32: #{tpu_custom_call.1} parent=15 // pred_fallthru
          _
        // Predicated region
        $region33: #{tpu_custom_call.1} parent=15 // pred_check
          %p300 = pneg %p162
        $region34: #{tpu_custom_call.1} parent=15 // pred_check_branch
          %302 = sbr.rel (%p300) target = $region36
        $region35: #{tpu_custom_call.1} parent=15 // pred_region
          %s303 = smul.u32 2, %s24
          %p304 = scmp.lt.s32.totalorder %s23, 1
          %s305 = scalar_select %p304, %s23, 1
          %p306 = scmp.lt.s32.totalorder %s303, 1
          %s307 = scalar_select %p306, %s303, 1
          %s308 = smul.addr %s305, 2
          %s309 = sadd.s32 %s307, %s308
          %s310 = smul.addr %s309, 4
          %s311 = scalar_lea.vmem %s4, %s310
          %s312 = smul.u32 2, %s24
        $region36: #{tpu_custom_call.1} parent=15 // pred_fallthru
          _
      $region16: #{tpu_custom_call.1} parent=5 // pred_fallthru
        _
      %p313 = scmp.le.s32.totalorder 1, %s16
      %p314 = scmp.lt.s32.totalorder %s16, 3
      %p315 = pnand %p313, %p314
      %p316 = pneg %p315
      // Predicated region
      $region37: #{tpu_custom_call.1} parent=5 // pred_check
        _
      $region38: #{tpu_custom_call.1} parent=5 // pred_check_branch
        %318 = sbr.rel (%p315) target = $region40
      $region39: #{tpu_custom_call.1} parent=5 // pred_region
        %s319 = ssub.s32 %s16, 1
        %s320 = smul.u32 2, %s26
        %p321 = scmp.lt.s32.totalorder %s25, 1
        %s322 = scalar_select %p321, %s25, 1
        %p323 = scmp.lt.s32.totalorder %s320, 1
        %s324 = scalar_select %p323, %s320, 1
        %s325 = smul.addr %s322, 2
        %s326 = sadd.s32 %s324, %s325
        %s327 = smul.addr %s326, 8
        %s328 = scalar_lea.vmem %s0, %s327
        %p329 = pneg %p56
        %p330 = pneg %p53
        %s331 = smul.u32 2, %s26
        %p332 = scmp.lt.s32.totalorder %s25, 1
        %s333 = scalar_select %p332, %s25, 1
        %p334 = scmp.lt.s32.totalorder %s331, 1
        %s335 = scalar_select %p334, %s331, 1
        %s336 = smul.addr %s333, 2
        %s337 = sadd.s32 %s335, %s336
        %s338 = scalar_lea.vmem %s1, %s337
        %p339 = pneg %p84
        %p340 = pneg %p81
        %s341 = smul.u32 2, %s26
        %p342 = scmp.lt.s32.totalorder %s25, 1
        %s343 = scalar_select %p342, %s25, 1
        %p344 = scmp.lt.s32.totalorder %s341, 1
        %s345 = scalar_select %p344, %s341, 1
        %s346 = smul.addr %s343, 2
        %s347 = sadd.s32 %s345, %s346
        %s348 = scalar_lea.vmem %s2, %s347
        %p349 = pneg %p112
        %p350 = pneg %p109
        %s351 = smul.u32 2, %s26
        %p352 = scmp.lt.s32.totalorder %s25, 1
        %s353 = scalar_select %p352, %s25, 1
        %p354 = scmp.lt.s32.totalorder %s351, 1
        %s355 = scalar_select %p354, %s351, 1
        %s356 = smul.addr %s353, 2
        %s357 = sadd.s32 %s355, %s356
        %s358 = smul.addr %s357, 4
        %s359 = scalar_lea.vmem %s3, %s358
        %p360 = pneg %p140
        %p361 = pneg %p137
        %s362 = smul.u32 2, %s26
        %p363 = scmp.lt.s32.totalorder %s25, 1
        %s364 = scalar_select %p363, %s25, 1
        %p365 = scmp.lt.s32.totalorder %s362, 1
        %s366 = scalar_select %p365, %s362, 1
        %s367 = smul.addr %s364, 2
        %s368 = sadd.s32 %s366, %s367
        %s369 = smul.addr %s368, 4
        %s370 = scalar_lea.vmem %s4, %s369
        %p371 = pneg %p168
        %p372 = pneg %p165
        %p373 = pneg %p189
        %p374 = pneg %p186
        %p375 = pneg %p210
        %p376 = pneg %p207
        %p377 = pneg %p231
        %p378 = pneg %p228
        %s379 = smul.u32 2, %s26
        %p380 = scmp.lt.s32.totalorder %s25, 1
        %s381 = scalar_select %p380, %s25, 1
        %p382 = scmp.lt.s32.totalorder %s379, 1
        %s383 = scalar_select %p382, %s379, 1
        %s384 = smul.addr %s381, 2
        %s385 = sadd.s32 %s383, %s384
        %s386 = smul.addr %s385, 8
        %s387 = scalar_lea.vmem %s0, %s386
        %s388 = smul.u32 2, %s26
        %s389 = smul.u32 2, %s26
        %p390 = scmp.lt.s32.totalorder %s25, 1
        %s391 = scalar_select %p390, %s25, 1
        %p392 = scmp.lt.s32.totalorder %s389, 1
        %s393 = scalar_select %p392, %s389, 1
        %s394 = smul.addr %s391, 2
        %s395 = sadd.s32 %s393, %s394
        %s396 = scalar_lea.vmem %s1, %s395
        %s397 = smul.u32 2, %s26
        %s398 = smul.u32 2, %s26
        %p399 = scmp.lt.s32.totalorder %s25, 1
        %s400 = scalar_select %p399, %s25, 1
        %p401 = scmp.lt.s32.totalorder %s398, 1
        %s402 = scalar_select %p401, %s398, 1
        %s403 = smul.addr %s400, 2
        %s404 = sadd.s32 %s402, %s403
        %s405 = scalar_lea.vmem %s2, %s404
        %s406 = smul.u32 2, %s26
        %s407 = smul.u32 2, %s26
        %p408 = scmp.lt.s32.totalorder %s25, 1
        %s409 = scalar_select %p408, %s25, 1
        %p410 = scmp.lt.s32.totalorder %s407, 1
        %s411 = scalar_select %p410, %s407, 1
        %s412 = smul.addr %s409, 2
        %s413 = sadd.s32 %s411, %s412
        %s414 = smul.addr %s413, 4
        %s415 = scalar_lea.vmem %s3, %s414
        %s416 = smul.u32 2, %s26
        %s417 = smul.u32 2, %s26
        %p418 = scmp.lt.s32.totalorder %s25, 1
        %s419 = scalar_select %p418, %s25, 1
        %p420 = scmp.lt.s32.totalorder %s417, 1
        %s421 = scalar_select %p420, %s417, 1
        %s422 = smul.addr %s419, 2
        %s423 = sadd.s32 %s421, %s422
        %s424 = smul.addr %s423, 4
        %s425 = scalar_lea.vmem %s4, %s424
        %s426 = smul.u32 2, %s26
        %p427 = scmp.eq.s32.totalorder %s25, 0
        %p428 = scmp.eq.s32.totalorder %s26, 0
        %p429 = pnand %p427, %p428
        %p430 = pneg %p429
        // Predicated region
        $region41: #{tpu_custom_call.1} parent=39 // pred_check
          _
        $region42: #{tpu_custom_call.1} parent=39 // pred_check_branch
          %432 = sbr.rel (%p429) target = $region44
        $region43: #{tpu_custom_call.1} parent=39 // pred_region
          %v433 = vlaneseq
          %vm434 = vcmp.ge.s32.totalorder %v433, 0
          %vm435 = vcmp.lt.s32.totalorder %v433, 256
          %vm436 = vmand %vm434, %vm435
          %437 = vst.msk [vmem:[#allocation2] sm:$0x3] %vm436, 0.0
          %438 = vst.msk [vmem:[#allocation3] sm:$0x3] %vm436, 0.0
          %439 = vst.msk [vmem:[#allocation4] sm:$0x3] %vm436, 0.0
          %440 = vst.msk [vmem:[#allocation5] sm:$0x3] %vm436, 0.0
        $region44: #{tpu_custom_call.1} parent=39 // pred_fallthru
          _
        %v441 = vld [vmem:[%s387] sm:$0x1f]
        %v442 = vld [vmem:[%s387 + $0x8] sm:$0x1f]
        %v443 = vld [vmem:[%s396] sm:$0x3]
        %v444 = vld [vmem:[%s405] sm:$0x3]
        %v445 = vld [vmem:[%s415] sm:$0xff]
        %v446 = vld [vmem:[%s425] sm:$0xff]
        %v447 = vlaneseq
        %v448 = vand.u32 %v447, 127
        %v449 = vadd.s32 %v448, 128
        %s450 = smul.u32 %s26, 256
        %v451 = vstv %s450
        %v452 = vadd.s32 %v451, %v448
        %v453 = vadd.s32 %v451, %v449
        %vm454 = vcmp.lt.s32.totalorder %v452, 256
        %vm455 = vcmp.lt.s32.totalorder %v453, 256
        %vm456 = vcmp.eq.s32.totalorder %v444, 1
        %v457 = vsel %vm454, 1, 0
        %v458 = vsel %vm455, 1, 0
        %v459 = vcombine.low %v457, %v458
        %v461 = vunpack.c.l.s4 1966171168
        %v462 = vunpack.c.0.s8 %v461
        %v463 = vlaneseq
        %v464 = vshrl.u32 %v463, 7
        %v465 = vsub.s32 %v462, %v464
        %v466 = vrot.slane %v459, %v465
        %v468 = vunpack.c.l.s4 1966171168
        %v469 = vunpack.c.0.s8 %v468
        %v470 = vlaneseq
        %v471 = vshrl.u32 %v470, 7
        %v472 = vsub.s32 %v469, %v471
        %v473 = vrot.slane %v466, %v472
        %vm474 = vcmp.ne.s32.totalorder %v473, 0
        %vm475 = vmand %vm456, %vm474
        %vm476 = vcmp.gt.s32.totalorder %v443, 0
        %vm477 = vmand %vm476, %vm475
        %vm478 = vcmask 1044480
        %v479 = vsel %vm478, %v441, -inf
        %v480 = vrot.slane %v479, 4
        %v481 = vmax.f32 %v479, %v480
        %v482 = vrot.slane %v481, 2
        %v483 = vmax.f32 %v481, %v482
        %v484 = vrot.slane %v483, 1
        %v485 = vmax.f32 %v483, %v484
        %v486 = vsel %vm478, %v442, -inf
        %v487 = vrot.slane %v486, 4
        %v488 = vmax.f32 %v486, %v487
        %v489 = vrot.slane %v488, 2
        %v490 = vmax.f32 %v488, %v489
        %v491 = vrot.slane %v490, 1
        %v492 = vmax.f32 %v490, %v491
        %v493 = vsub.f32 %v441, %v485
        %v494 = vsub.f32 %v442, %v492
        %v495 = vmul.f32 %v493, 1.442695
        %v496 = vpow.pop %v495
        %v497 = vmul.f32 %v494, 1.442695
        %v498 = vpow.pop %v497
        %v499 = vsel %vm478, %v496, 0.0
        %v500 = vrot.slane %v499, 4
        %v501 = vadd.f32 %v499, %v500
        %v502 = vrot.slane %v501, 2
        %v503 = vadd.f32 %v501, %v502
        %v504 = vrot.slane %v503, 1
        %v505 = vadd.f32 %v503, %v504
        %v506 = vsel %vm478, %v498, 0.0
        %v507 = vrot.slane %v506, 4
        %v508 = vadd.f32 %v506, %v507
        %v509 = vrot.slane %v508, 2
        %v510 = vadd.f32 %v508, %v509
        %v511 = vrot.slane %v510, 1
        %v512 = vadd.f32 %v510, %v511
        %v513 = vlaneseq
        %v514 = vshrl.u32 %v513, 7
        %v515 = vlaneseq
        %v516 = vshrl.u32 %v515, 7
        %v517 = vsub.s32 0, %v516
        %v518 = vrot.slane %v443, %v517
        %v519 = vlaneseq
        %v520 = vshrl.u32 %v519, 7
        %v521 = vsub.s32 1, %v520
        %v522 = vrot.slane %v443, %v521
        %vm523 = vcmp.eq.s32.totalorder %v514, %v518
        %vm524 = vcmp.eq.s32.totalorder %v514, %v522
        %v525 = vsel %vm523, 1, 0
        %v526 = vsel %vm524, 1, 0
        %v527 = vcvt.s32.f32 %v525
        %v528 = vcvt.s32.f32 %v526
        %v529 = vmul.f32 %v527, %v493
        %v530 = vmul.f32 %v528, %v494
        %v531 = vsel %vm478, %v529, 0.0
        %v532 = vrot.slane %v531, 4
        %v533 = vadd.f32 %v531, %v532
        %v534 = vrot.slane %v533, 2
        %v535 = vadd.f32 %v533, %v534
        %v536 = vrot.slane %v535, 1
        %v537 = vadd.f32 %v535, %v536
        %v538 = vsel %vm478, %v530, 0.0
        %v539 = vrot.slane %v538, 4
        %v540 = vadd.f32 %v538, %v539
        %v541 = vrot.slane %v540, 2
        %v542 = vadd.f32 %v540, %v541
        %v543 = vrot.slane %v542, 1
        %v544 = vadd.f32 %v542, %v543
        %v545 = vmul.f32 %v527, %v496
        %v546 = vmul.f32 %v528, %v498
        %v547 = vsel %vm478, %v545, 0.0
        %v548 = vrot.slane %v547, 4
        %v549 = vadd.f32 %v547, %v548
        %v550 = vrot.slane %v549, 2
        %v551 = vadd.f32 %v549, %v550
        %v552 = vrot.slane %v551, 1
        %v553 = vadd.f32 %v551, %v552
        %v554 = vsel %vm478, %v546, 0.0
        %v555 = vrot.slane %v554, 4
        %v556 = vadd.f32 %v554, %v555
        %v557 = vrot.slane %v556, 2
        %v558 = vadd.f32 %v556, %v557
        %v559 = vrot.slane %v558, 1
        %v560 = vadd.f32 %v558, %v559
        %v561 = vrcp.pop %v505
        %v562 = vmul.f32 %v553, %v561
        %v563 = vrcp.pop %v512
        %v564 = vmul.f32 %v560, %v563
        %v565 = vlog2.pop %v505
        %v566 = vmul.f32 %v565, 0.6931472
        %v567 = vlog2.pop %v512
        %v568 = vmul.f32 %v567, 0.6931472
        %v569 = vsub.f32 %v537, %v566
        %v570 = vsub.f32 %v544, %v568
        %v571 = vsub.f32 1.0, %v562
        %v572 = vsub.f32 1.0, %v564
        %v573 = vmul.f32 %v571, %v571
        %v574 = vmul.f32 %v572, %v572
        %v575 = vmul.f32 %v573, -0.25
        %v576 = vmul.f32 %v574, -0.25
        %v577 = vmul.f32 %v575, %v569
        %v578 = vmul.f32 %v576, %v570
        %v579 = vsub.f32 %v445, %v446
        %v580 = vand.u32 2147483647, %v579
        %vm581 = vcmp.lt.f32.partialorder %v580, 1.0
        %v582 = vmul.f32 %v579, 0.5
        %v583 = vmul.f32 %v582, %v579
        %v584 = vsub.f32 %v580, 0.5
        %v585 = vsel %vm581, %v583, %v584
        %v586 = vsel %vm477, 1, 0
        %v587 = vlaneseq
        %v588 = vshrl.u32 %v587, 7
        %v589 = vsub.s32 0, %v588
        %v590 = vrot.slane %v586, %v589
        %v591 = vlaneseq
        %v592 = vshrl.u32 %v591, 7
        %v593 = vsub.s32 1, %v592
        %v594 = vrot.slane %v586, %v593
        %vm595 = vcmp.eq.s32.totalorder %v590, 1
        %vm596 = vcmp.eq.s32.totalorder %v594, 1
        %v598 = vcombine.high %v585, %v585
        %v600 = vsel %vm595, %v585, 0.0
        %v601 = vsel %vm596, %v598, 0.0
        %vm602 = vcmask 1043456
        %v603 = vsel %vm602, %v600, 0.0
        %v604 = vrot.slane %v603, 4
        %v605 = vadd.f32 %v603, %v604
        %v606 = vrot.slane %v605, 2
        %v607 = vadd.f32 %v605, %v606
        %v608 = vrot.slane %v607, 1
        %v609 = vadd.f32 %v607, %v608
        %v610 = vsel %vm602, %v601, 0.0
        %v611 = vrot.slane %v610, 4
        %v612 = vadd.f32 %v610, %v611
        %v613 = vrot.slane %v612, 2
        %v614 = vadd.f32 %v612, %v613
        %v615 = vrot.slane %v614, 1
        %v616 = vadd.f32 %v614, %v615
        %v617 = vld [vmem:[#allocation2] sm:$0x3]
        %v620 = vcombine.low %v577, %v578
        %v622 = vunpack.c.l.s4 1966171168
        %v623 = vunpack.c.0.s8 %v622
        %v624 = vlaneseq
        %v625 = vshrl.u32 %v624, 7
        %v626 = vsub.s32 %v623, %v625
        %v627 = vrot.slane %v620, %v626
        %v629 = vunpack.c.l.s4 1966171168
        %v630 = vunpack.c.0.s8 %v629
        %v631 = vlaneseq
        %v632 = vshrl.u32 %v631, 7
        %v633 = vsub.s32 %v630, %v632
        %v634 = vrot.slane %v627, %v633
        %v636 = vsel %vm475, %v634, 0.0
        %v637 = vadd.f32 %v617, %v636
        %v638 = vlaneseq
        %vm639 = vcmp.ge.s32.totalorder %v638, 0
        %vm640 = vcmp.lt.s32.totalorder %v638, 256
        %vm641 = vmand %vm639, %vm640
        %642 = vst.msk [vmem:[#allocation2] sm:$0x3] %vm641, %v637
        %v643 = vld [vmem:[#allocation3] sm:$0x3]
        %v644 = vsel %vm475, 1, 0
        %v645 = vcvt.s32.f32 %v644
        %v646 = vadd.f32 %v643, %v645
        %647 = vst.msk [vmem:[#allocation3] sm:$0x3] %vm641, %v646
        %v648 = vld [vmem:[#allocation4] sm:$0x3]
        %v651 = vcombine.low %v609, %v616
        %v653 = vunpack.c.l.s4 1966171168
        %v654 = vunpack.c.0.s8 %v653
        %v655 = vlaneseq
        %v656 = vshrl.u32 %v655, 7
        %v657 = vsub.s32 %v654, %v656
        %v658 = vrot.slane %v651, %v657
        %v660 = vunpack.c.l.s4 1966171168
        %v661 = vunpack.c.0.s8 %v660
        %v662 = vlaneseq
        %v663 = vshrl.u32 %v662, 7
        %v664 = vsub.s32 %v661, %v663
        %v665 = vrot.slane %v658, %v664
        %v667 = vadd.f32 %v648, %v665
        %668 = vst.msk [vmem:[#allocation4] sm:$0x3] %vm641, %v667
        %v669 = vld [vmem:[#allocation5] sm:$0x3]
        %v670 = vcvt.s32.f32 %v586
        %v671 = vadd.f32 %v669, %v670
        %672 = vst.msk [vmem:[#allocation5] sm:$0x3] %vm641, %v671
        %p673 = scmp.eq.s32.totalorder %s25, 1
        %p674 = pnand %p673, %p428
        %p675 = pneg %p674
        // Predicated region
        $region45: #{tpu_custom_call.1} parent=39 // pred_check
          _
        $region46: #{tpu_custom_call.1} parent=39 // pred_check_branch
          %677 = sbr.rel (%p674) target = $region48
        $region47: #{tpu_custom_call.1} parent=39 // pred_region
          %v678 = vld [vmem:[#allocation2] sm:$0x3]
          %v680 = vlaneseq
          %v681 = vshrl.u32 %v680, 7
          %v682 = vsub.s32 0, %v681
          %v683 = vrot.slane %v678, %v682
          %v684 = vlaneseq
          %v685 = vshrl.u32 %v684, 7
          %v686 = vsub.s32 1, %v685
          %v687 = vrot.slane %v678, %v686
          %vm690 = vcmask 1040384
          %v691 = vsel %vm690, %v683, 0.0
          %v692 = vsel %vm690, %v687, 0.0
          %v693 = vadd.f32 %v691, %v692
          %694 = vadd.xlane.f32.xlu0 %v693
          %v695 = vpop.xlane.xlu0 %694
          %v696 = vrot.slane %v695, 4
          %v697 = vadd.f32 %v695, %v696
          %v698 = vrot.slane %v697, 2
          %v699 = vadd.f32 %v697, %v698
          %v700 = vrot.slane %v699, 1
          %v701 = vadd.f32 %v699, %v700
          %s702 = vtos %v701
          %v703 = vld [vmem:[#allocation3] sm:$0x3]
          %v705 = vlaneseq
          %v706 = vshrl.u32 %v705, 7
          %v707 = vsub.s32 0, %v706
          %v708 = vrot.slane %v703, %v707
          %v709 = vlaneseq
          %v710 = vshrl.u32 %v709, 7
          %v711 = vsub.s32 1, %v710
          %v712 = vrot.slane %v703, %v711
          %v715 = vsel %vm690, %v708, 0.0
          %v716 = vsel %vm690, %v712, 0.0
          %v717 = vadd.f32 %v715, %v716
          %718 = vadd.xlane.f32.xlu0 %v717
          %v719 = vpop.xlane.xlu0 %718
          %v720 = vrot.slane %v719, 4
          %v721 = vadd.f32 %v719, %v720
          %v722 = vrot.slane %v721, 2
          %v723 = vadd.f32 %v721, %v722
          %v724 = vrot.slane %v723, 1
          %v725 = vadd.f32 %v723, %v724
          %s726 = vtos %v725
          %v727 = vld [vmem:[#allocation4] sm:$0x3]
          %v729 = vlaneseq
          %v730 = vshrl.u32 %v729, 7
          %v731 = vsub.s32 0, %v730
          %v732 = vrot.slane %v727, %v731
          %v733 = vlaneseq
          %v734 = vshrl.u32 %v733, 7
          %v735 = vsub.s32 1, %v734
          %v736 = vrot.slane %v727, %v735
          %v739 = vsel %vm690, %v732, 0.0
          %v740 = vsel %vm690, %v736, 0.0
          %v741 = vadd.f32 %v739, %v740
          %742 = vadd.xlane.f32.xlu0 %v741
          %v743 = vpop.xlane.xlu0 %742
          %v744 = vrot.slane %v743, 4
          %v745 = vadd.f32 %v743, %v744
          %v746 = vrot.slane %v745, 2
          %v747 = vadd.f32 %v745, %v746
          %v748 = vrot.slane %v747, 1
          %v749 = vadd.f32 %v747, %v748
          %s750 = vtos %v749
          %v751 = vld [vmem:[#allocation5] sm:$0x3]
          %v753 = vlaneseq
          %v754 = vshrl.u32 %v753, 7
          %v755 = vsub.s32 0, %v754
          %v756 = vrot.slane %v751, %v755
          %v757 = vlaneseq
          %v758 = vshrl.u32 %v757, 7
          %v759 = vsub.s32 1, %v758
          %v760 = vrot.slane %v751, %v759
          %v763 = vsel %vm690, %v756, 0.0
          %v764 = vsel %vm690, %v760, 0.0
          %v765 = vadd.f32 %v763, %v764
          %766 = vadd.xlane.f32.xlu0 %v765
          %v767 = vpop.xlane.xlu0 %766
          %v768 = vrot.slane %v767, 4
          %v769 = vadd.f32 %v767, %v768
          %v770 = vrot.slane %v769, 2
          %v771 = vadd.f32 %v769, %v770
          %v772 = vrot.slane %v771, 1
          %v773 = vadd.f32 %v771, %v772
          %s774 = vtos %v773
          %s775 = smul.f32 %s774, 4.0
          %p776 = scmp.gt.f32.partialorder %s726, 0.0
          %s777 = smax.f32 %s726, 1.0
          %v778 = vstv %s777
          %v779 = vrcp.pop %v778
          %s780 = vtos %v779
          %s781 = smul.f32 %s702, %s780
          %s782 = scalar_select %p776, %s781, 0.0
          %p783 = scmp.gt.f32.partialorder %s775, 0.0
          %s784 = smax.f32 %s775, 1.0
          %v785 = vstv %s784
          %v786 = vrcp.pop %v785
          %s787 = vtos %v786
          %s788 = smul.f32 %s750, %s787
          %s789 = scalar_select %p783, %s788, 0.0
          %s790 = smul.f32 %s782, 2.0
          %s791 = sadd.f32 %s790, %s789
          %s792 = scalar_select %p783, %s791, %s782
          %s793 = scalar_lea.smem [#allocation6], 0
          %794 = sst [smem:[%s793]] %s792
          %s795 = scalar_lea.smem [#allocation8], 0
          %796 = sst [smem:[%s795]] %s782
          %s797 = scalar_lea.smem [#allocation10], 0
          %798 = sst [smem:[%s797]] %s789
        $region48: #{tpu_custom_call.1} parent=39 // pred_fallthru
          _
        // Predicated region
        $region49: #{tpu_custom_call.1} parent=39 // pred_check
          %p799 = pneg %p186
        $region50: #{tpu_custom_call.1} parent=39 // pred_check_branch
          %801 = sbr.rel (%p799) target = $region52
        $region51: #{tpu_custom_call.1} parent=39 // pred_region
          %s803 = ssub.s32 16, 16
          %804 = vsyncadd [#allocation7], %s803
          %807 = dma.smem_to_hbm [#allocation6], 16, %s5, [#allocation7]
        $region52: #{tpu_custom_call.1} parent=39 // pred_fallthru
          _
        // Predicated region
        $region53: #{tpu_custom_call.1} parent=39 // pred_check
          %p808 = pneg %p207
        $region54: #{tpu_custom_call.1} parent=39 // pred_check_branch
          %810 = sbr.rel (%p808) target = $region56
        $region55: #{tpu_custom_call.1} parent=39 // pred_region
          %s812 = ssub.s32 16, 16
          %813 = vsyncadd [#allocation9], %s812
          %816 = dma.smem_to_hbm [#allocation8], 16, %s6, [#allocation9]
        $region56: #{tpu_custom_call.1} parent=39 // pred_fallthru
          _
        // Predicated region
        $region57: #{tpu_custom_call.1} parent=39 // pred_check
          %p817 = pneg %p228
        $region58: #{tpu_custom_call.1} parent=39 // pred_check_branch
          %819 = sbr.rel (%p817) target = $region60
        $region59: #{tpu_custom_call.1} parent=39 // pred_region
          %s821 = ssub.s32 16, 16
          %822 = vsyncadd [#allocation9], %s821
          %825 = dma.smem_to_hbm [#allocation10], 16, %s7, [#allocation9]
        $region60: #{tpu_custom_call.1} parent=39 // pred_fallthru
          _
        // Predicated region
        $region61: #{tpu_custom_call.1} parent=39 // pred_check
          %p826 = pneg %p186
        $region62: #{tpu_custom_call.1} parent=39 // pred_check_branch
          %828 = sbr.rel (%p826) target = $region64
        $region63: #{tpu_custom_call.1} parent=39 // pred_region
          %829 = dma.done [#allocation7], 16
        $region64: #{tpu_custom_call.1} parent=39 // pred_fallthru
          _
        // Predicated region
        $region65: #{tpu_custom_call.1} parent=39 // pred_check
          %p830 = pneg %p207
        $region66: #{tpu_custom_call.1} parent=39 // pred_check_branch
          %832 = sbr.rel (%p830) target = $region68
        $region67: #{tpu_custom_call.1} parent=39 // pred_region
          %833 = dma.done [#allocation9], 16
        $region68: #{tpu_custom_call.1} parent=39 // pred_fallthru
          _
        // Predicated region
        $region69: #{tpu_custom_call.1} parent=39 // pred_check
          %p834 = pneg %p228
        $region70: #{tpu_custom_call.1} parent=39 // pred_check_branch
          %836 = sbr.rel (%p834) target = $region72
        $region71: #{tpu_custom_call.1} parent=39 // pred_region
          %837 = dma.done [#allocation9], 16
        $region72: #{tpu_custom_call.1} parent=39 // pred_fallthru
          _
        %838 = sfence
      $region40: #{tpu_custom_call.1} parent=5 // pred_fallthru
        _
      %p839 = scmp.le.s32.totalorder 2, %s16
      // Predicated region
      $region73: #{tpu_custom_call.1} parent=5 // pred_check
        %p840 = pneg %p839
      $region74: #{tpu_custom_call.1} parent=5 // pred_check_branch
        %842 = sbr.rel (%p840) target = $region76
      $region75: #{tpu_custom_call.1} parent=5 // pred_region
        %s843 = ssub.s32 %s16, 2
      $region76: #{tpu_custom_call.1} parent=5 // pred_fallthru
        _
    $region6: #{tpu_custom_call.1} parent=1 // loop_footer
      %s20 = sadd.s32 1, %s16
    $region7: #{tpu_custom_call.1} parent=1 // loop_footer_branch
      %15 = sbr.rel target = $region3
    $region8: #{tpu_custom_call.1} parent=1 // loop_exit
      _
    %844 = vsyncpa [#allocation7], 1
    %s845 = scalar_lea.sflag [#allocation7], 1
    %846 = vsyncpa %s845, 1
    %847 = vsyncpa [#allocation9], 1

</llo_original>
